<compile_context>
chip_gen: v7x
topology: tpu7x:2x2x1
jax: 0.10.0
libtpu: 0.0.40
codegen_flags: <defaults>
</compile_context>

<pallas_src>
import math

import jax
import jax.numpy as jnp
import numpy as np
from jax.experimental import pallas as pl
from jax.experimental.pallas import tpu as pltpu


def _round_up(a, m):
    return (a + m - 1) // m * m


def _pick_tile(n, cap=512):
    if n <= cap:
        return n
    for t in (512, 256, 128):
        if t <= cap and n % t == 0:
            return t
    return n


# ---------------------------------------------------------------------------
# Tiled linear kernel: y = (x @ W + b) * out_scale   (bf16 operands, f32 acc)
# ---------------------------------------------------------------------------
def _make_linear_kernel(out_scale):
    def kernel(x_ref, w_ref, b_ref, o_ref, acc_ref):
        @pl.when(pl.program_id(2) == 0)
        def _():
            acc_ref[...] = jnp.zeros(acc_ref.shape, acc_ref.dtype)

        acc_ref[...] += jnp.dot(x_ref[...], w_ref[...],
                                preferred_element_type=jnp.float32)

        @pl.when(pl.program_id(2) == pl.num_programs(2) - 1)
        def _():
            y = acc_ref[...] + b_ref[...]
            if out_scale != 1.0:
                y = y * out_scale
            o_ref[...] = y.astype(o_ref.dtype)

    return kernel


def linear_pallas(x, w, b, *, out_scale=1.0, out_dtype=jnp.float32,
                  tm=512, tn=512, tk=512):
    """x: (M, K), w: (K, N) (torch W^T), b: (N,) -> (M, N)."""
    M, K = x.shape
    N = w.shape[1]
    tm = min(tm, _round_up(M, 8))
    tn = min(tn, _round_up(N, 128))
    tk = min(tk, _round_up(K, 128))
    Mp, Kp, Np = _round_up(M, tm), _round_up(K, tk), _round_up(N, tn)

    xp = x.astype(jnp.bfloat16)
    wp = w.astype(jnp.bfloat16)
    if (Mp, Kp) != (M, K):
        xp = jnp.pad(xp, ((0, Mp - M), (0, Kp - K)))
    if (Kp, Np) != (K, N):
        wp = jnp.pad(wp, ((0, Kp - K), (0, Np - N)))
    bp = (b if Np == N else jnp.pad(b, (0, Np - N))).astype(jnp.float32).reshape(1, Np)

    out = pl.pallas_call(
        _make_linear_kernel(float(out_scale)),
        out_shape=jax.ShapeDtypeStruct((Mp, Np), out_dtype),
        grid=(Mp // tm, Np // tn, Kp // tk),
        in_specs=[
            pl.BlockSpec((tm, tk), lambda i, j, k: (i, k)),
            pl.BlockSpec((tk, tn), lambda i, j, k: (k, j)),
            pl.BlockSpec((1, tn), lambda i, j, k: (0, j)),
        ],
        out_specs=pl.BlockSpec((tm, tn), lambda i, j, k: (i, j)),
        scratch_shapes=[pltpu.VMEM((tm, tn), jnp.float32)],
        compiler_params=pltpu.CompilerParams(
            dimension_semantics=("parallel", "parallel", "arbitrary")),
    )(xp, wp, bp)
    if (Mp, Np) != (M, N):
        out = out[:M, :N]
    return out


# ---------------------------------------------------------------------------
# Fused self-attention QKV projection: one pass over x, three GEMMs, 3 outputs
# ---------------------------------------------------------------------------
def _make_qkv_kernel(q_scale):
    def kernel(x_ref, wq_ref, wk_ref, wv_ref, bq_ref, bk_ref, bv_ref,
               q_ref, k_ref, v_ref, accq, acck, accv):
        @pl.when(pl.program_id(2) == 0)
        def _():
            accq[...] = jnp.zeros(accq.shape, accq.dtype)
            acck[...] = jnp.zeros(acck.shape, acck.dtype)
            accv[...] = jnp.zeros(accv.shape, accv.dtype)

        xb = x_ref[...]
        accq[...] += jnp.dot(xb, wq_ref[...], preferred_element_type=jnp.float32)
        acck[...] += jnp.dot(xb, wk_ref[...], preferred_element_type=jnp.float32)
        accv[...] += jnp.dot(xb, wv_ref[...], preferred_element_type=jnp.float32)

        @pl.when(pl.program_id(2) == pl.num_programs(2) - 1)
        def _():
            # 1/sqrt(dk2) folded into the Q projection epilogue (scores never rescaled).
            q_ref[...] = ((accq[...] + bq_ref[...]) * q_scale).astype(q_ref.dtype)
            k_ref[...] = (acck[...] + bk_ref[...]).astype(k_ref.dtype)
            v_ref[...] = (accv[...] + bv_ref[...]).astype(v_ref.dtype)

    return kernel


def qkv_proj_pallas(x, wq, wk, wv, bq, bk, bv, *, q_scale,
                    out_dtype=jnp.bfloat16, tm=512, tn=512, tk=512):
    M, K = x.shape
    N = wq.shape[1]
    tm = min(tm, _round_up(M, 8))
    tn = min(tn, _round_up(N, 128))
    tk = min(tk, _round_up(K, 128))
    Mp, Kp, Np = _round_up(M, tm), _round_up(K, tk), _round_up(N, tn)

    def padw(w):
        w = w.astype(jnp.bfloat16)
        return w if (Kp, Np) == (K, N) else jnp.pad(w, ((0, Kp - K), (0, Np - N)))

    def padb(b):
        b = b.astype(jnp.float32)
        return (b if Np == N else jnp.pad(b, (0, Np - N))).reshape(1, Np)

    xp = x.astype(jnp.bfloat16)
    if (Mp, Kp) != (M, K):
        xp = jnp.pad(xp, ((0, Mp - M), (0, Kp - K)))

    w_spec = pl.BlockSpec((tk, tn), lambda i, j, k: (k, j))
    b_spec = pl.BlockSpec((1, tn), lambda i, j, k: (0, j))
    o_spec = pl.BlockSpec((tm, tn), lambda i, j, k: (i, j))
    o_shape = jax.ShapeDtypeStruct((Mp, Np), out_dtype)

    q, k, v = pl.pallas_call(
        _make_qkv_kernel(float(q_scale)),
        out_shape=(o_shape, o_shape, o_shape),
        grid=(Mp // tm, Np // tn, Kp // tk),
        in_specs=[pl.BlockSpec((tm, tk), lambda i, j, k: (i, k)),
                  w_spec, w_spec, w_spec, b_spec, b_spec, b_spec],
        out_specs=(o_spec, o_spec, o_spec),
        scratch_shapes=[pltpu.VMEM((tm, tn), jnp.float32)] * 3,
        compiler_params=pltpu.CompilerParams(
            dimension_semantics=("parallel", "parallel", "arbitrary")),
    )(xp, padw(wq), padw(wk), padw(wv), padb(bq), padb(bk), padb(bv))
    if (Mp, Np) != (M, N):
        q, k, v = q[:M, :N], k[:M, :N], v[:M, :N]
    return q, k, v


# ---------------------------------------------------------------------------
# Differential-attention core (flash-style, q-tiled and kv-tiled)
# ---------------------------------------------------------------------------
def _make_diff_attn_kernel(return_attn):
    def kernel(lam_ref, q_ref, k_ref, v_ref, *rest):
        if return_attn:
            o_ref, attn_ref, m_sc, l_sc, acc_sc = rest
        else:
            o_ref, m_sc, l_sc, acc_sc = rest
            attn_ref = None

        t = pl.program_id(3)

        @pl.when(t == 0)
        def _init():
            m_sc[...] = jnp.full(m_sc.shape, -jnp.inf, m_sc.dtype)
            l_sc[...] = jnp.zeros(l_sc.shape, l_sc.dtype)
            acc_sc[...] = jnp.zeros(acc_sc.shape, acc_sc.dtype)

        q = q_ref[...]     # (2, tq, dk2) bf16; 1/sqrt(dk2) already folded into Q proj
        kc = k_ref[...]    # (2, tk, dk2) bf16  (double-buffered per kv step)
        vc = v_ref[...]    # (tk, dk)     bf16

        # Both sub-head score blocks in one batched MXU call (bf16 operands, f32 acc).
        s = jax.lax.dot_general(
            q, kc, dimension_numbers=(((2,), (2,)), ((0,), (0,))),
            preferred_element_type=jnp.float32)             # (2, tq, tk)
        # TODO(synk): additive mask path (masked_fill(mask == 0, -1e9)) — mask=None only.

        m_prev = m_sc[...]
        m_new = jnp.maximum(m_prev, jnp.max(s, axis=-1, keepdims=True))
        alpha = jnp.exp(m_prev - m_new)
        # TODO(synk): if a bundle dump shows the EUP gating on v6e/v7x, compute this exp
        # in bf16 while keeping m/l/acc in f32.
        e = jnp.exp(s - m_new)                              # (2, tq, tk) f32
        l_sc[...] = alpha * l_sc[...] + jnp.sum(e, axis=-1, keepdims=True)

        ev = jax.lax.dot_general(
            e.astype(jnp.bfloat16), vc,
            dimension_numbers=(((2,), (0,)), ((), ())),
            preferred_element_type=jnp.float32)             # (2, tq, dk)
        acc_sc[...] = alpha * acc_sc[...] + ev
        m_sc[...] = m_new

        @pl.when(t == pl.num_programs(3) - 1)
        def _finalize():
            lam = lam_ref[0]
            r = pl.reciprocal(l_sc[...], approx=False)      # (2, tq, 1)
            o = acc_sc[0] * r[0] - (lam * r[1]) * acc_sc[1]
            o_ref[...] = o.astype(o_ref.dtype)
            if return_attn:
                # Only valid with a single KV tile (asserted in the wrapper).
                # Dropout is identity in eval mode.
                p = e[0] * r[0] - (lam * r[1]) * e[1]
                attn_ref[...] = p.astype(attn_ref.dtype)

    return kernel


def diff_attention_pallas(q2, k2, v, lambda_full, *, dk, fold_output,
                          return_attn=False):
    """q2/k2: (B, 2H, Nq|Nk, dk2) bf16.
    v: (B, Nk, H*dk) bf16 if fold_output else (B, H, Nk, dk) bf16.
    Returns (B, Nq, H*dk) bf16 if fold_output else (B, H, Nq, dk) bf16."""
    B, H2, Nq, dk2 = q2.shape
    H = H2 // 2
    Nk = k2.shape[2]

    tq = _pick_tile(Nq)
    tk = Nk if return_attn else _pick_tile(Nk)
    n_q, n_kv = Nq // tq, Nk // tk
    if return_attn:
        assert n_kv == 1, "return_attn requires a single KV tile"
        # TODO(synk): tile / bf16 the (Nq, Nk) attention-weights output for large Nk
        # (v7x VMEM) instead of forcing tk == Nk.

    q_spec = pl.BlockSpec((None, 2, tq, dk2), lambda b, h, qi, t: (b, h, qi, 0))
    k_spec = pl.BlockSpec((None, 2, tk, dk2), lambda b, h, qi, t: (b, h, t, 0))
    if fold_output:
        # V read as head column-slabs of the (B, Nk, H*dk) projection output; output
        # written straight into (B, Nq, H*dk). Lane dim stays dk (multiple of 128).
        v_spec = pl.BlockSpec((None, tk, dk), lambda b, h, qi, t: (b, t, h))
        o_spec = pl.BlockSpec((None, tq, dk), lambda b, h, qi, t: (b, qi, h))
        o_shape = jax.ShapeDtypeStruct((B, Nq, H * dk), jnp.bfloat16)
    else:
        v_spec = pl.BlockSpec((None, None, tk, dk), lambda b, h, qi, t: (b, h, t, 0))
        o_spec = pl.BlockSpec((None, None, tq, dk), lambda b, h, qi, t: (b, h, qi, 0))
        o_shape = jax.ShapeDtypeStruct((B, H, Nq, dk), jnp.bfloat16)

    if return_attn:
        out_shape = (o_shape, jax.ShapeDtypeStruct((B, H, Nq, Nk), jnp.float32))
        out_specs = (o_spec,
                     pl.BlockSpec((None, None, tq, Nk),
                                  lambda b, h, qi, t: (b, h, qi, 0)))
    else:
        out_shape = o_shape
        out_specs = o_spec

    res = pl.pallas_call(
        _make_diff_attn_kernel(return_attn),
        out_shape=out_shape,
        grid=(B, H, n_q, n_kv),
        in_specs=[
            pl.BlockSpec(memory_space=pltpu.MemorySpace.SMEM),   # lambda_full (1,)
            q_spec, k_spec, v_spec,
        ],
        out_specs=out_specs,
        scratch_shapes=[
            pltpu.VMEM((2, tq, 1), jnp.float32),    # running max
            pltpu.VMEM((2, tq, 1), jnp.float32),    # running denom
            pltpu.VMEM((2, tq, dk), jnp.float32),   # running numerator
        ],
        compiler_params=pltpu.CompilerParams(
            dimension_semantics=("parallel", "parallel", "parallel", "arbitrary")),
    )(jnp.reshape(lambda_full.astype(jnp.float32), (1,)), q2, k2, v)

    if return_attn:
        return res[0], res[1]
    return res, None


# ---------------------------------------------------------------------------
# Module wrapper (parameter setup + reshapes stay in plain JAX)
# ---------------------------------------------------------------------------
def init_params(key, h, d_model):
    assert d_model % h == 0
    diff_num_head = h // 2
    diff_d_k = d_model // diff_num_head
    ks = jax.random.split(key, 12)
    p = {
        "diff_num_head": diff_num_head,
        "diff_d_k": diff_d_k,
        "lambda_init": jnp.float32(0.8),
    }
    for i, name in enumerate(("q", "k", "v", "o")):
        p[f"w{name}"] = (0.02 * jax.random.normal(ks[i], (d_model, d_model))).astype(jnp.float32)
        p[f"b{name}"] = (0.02 * jax.random.normal(ks[4 + i], (d_model,))).astype(jnp.float32)
    for i, name in enumerate(("lambda_q1", "lambda_q2", "lambda_k1", "lambda_k2")):
        p[name] = (0.1 * jax.random.normal(ks[8 + i], (diff_d_k // 2,))).astype(jnp.float32)
    return p


def diff_mha_forward(params, query, key, value, return_attn=False):
    """Forward pass of DiffMultiHeadedAttention (eval mode, mask=None)."""
    B, Nq, d_model = query.shape
    Nk = key.shape[1]
    H = params["diff_num_head"]
    dk = params["diff_d_k"]
    dk2 = dk // 2
    scale = 1.0 / math.sqrt(dk2)
    fold = (dk % 128 == 0)   # head slabs / output stores are lane-aligned

    # Projections (bf16 activations; 1/sqrt(dk2) folded into the Q GEMM epilogue).
    # TODO(synk): pre-cast the f32 weights to bf16 once outside the forward if the
    # parameter store allows it (saves a d_model^2 cast pass per weight per call).
    if (key is query) and (value is query):
        q_p, k_p, v_p = qkv_proj_pallas(
            query.reshape(B * Nq, d_model),
            params["wq"], params["wk"], params["wv"],
            params["bq"], params["bk"], params["bv"], q_scale=scale)
    else:
        q_p = linear_pallas(query.reshape(B * Nq, d_model), params["wq"], params["bq"],
                            out_scale=scale, out_dtype=jnp.bfloat16)
        k_p = linear_pallas(key.reshape(B * Nk, d_model), params["wk"], params["bk"],
                            out_dtype=jnp.bfloat16)
        v_p = linear_pallas(value.reshape(B * Nk, d_model), params["wv"], params["bv"],
                            out_dtype=jnp.bfloat16)

    # (B*N, d_model) -> (B, 2H, N, dk2): the same raw row-major reshape the torch code
    # performs inside diff_attention (it interleaves query rows across the sub-heads).
    # TODO(synk): folding this transpose into the attention BlockSpecs is blocked by the
    # stride-2 row mapping of the (B,H,N,dk)->(B,2H,N,dk2) reshape.
    def subheads(y, n):
        return y.reshape(B, n, H, dk).transpose(0, 2, 1, 3).reshape(B, 2 * H, n, dk2)

    q2 = subheads(q_p, Nq)
    k2 = subheads(k_p, Nk)
    if fold:
        v_in = v_p.reshape(B, Nk, H * dk)                       # no transpose pass
    else:
        v_in = v_p.reshape(B, Nk, H, dk).transpose(0, 2, 1, 3)  # (B, H, Nk, dk)

    lambda1 = jnp.exp(jnp.sum(params["lambda_q1"] * params["lambda_k1"]))
    lambda2 = jnp.exp(jnp.sum(params["lambda_q2"] * params["lambda_k2"]))
    lambda_full = lambda1 - lambda2 + params["lambda_init"]

    x, attn = diff_attention_pallas(q2, k2, v_in, lambda_full, dk=dk,
                                    fold_output=fold, return_attn=return_attn)

    if fold:
        x2d = x.reshape(B * Nq, H * dk)                         # already (B, Nq, d_model)
    else:
        x2d = x.transpose(0, 2, 1, 3).reshape(B * Nq, H * dk)
    out = linear_pallas(x2d, params["wo"], params["bo"],
                        out_dtype=jnp.float32).reshape(B, Nq, d_model)
    return out, attn


# ---------------------------------------------------------------------------
# Pure-JAX reference (mirrors the torch code) for validation
# ---------------------------------------------------------------------------
def diff_mha_reference(params, query, key, value):
    B, N, d_model = query.shape
    H = params["diff_num_head"]
    dk = params["diff_d_k"]

    def proj(x, w, b):
        y = x.reshape(B * N, d_model) @ w + b
        return y.reshape(B, N, H, dk).transpose(0, 2, 1, 3)

    q = proj(query, params["wq"], params["bq"])
    k = proj(key, params["wk"], params["bk"])
    v = proj(value, params["wv"], params["bv"])

    lambda1 = jnp.exp(jnp.sum(params["lambda_q1"] * params["lambda_k1"]))
    lambda2 = jnp.exp(jnp.sum(params["lambda_q2"] * params["lambda_k2"]))
    lambda_full = lambda1 - lambda2 + params["lambda_init"]

    q2 = q.reshape(B, 2 * H, N, dk // 2)
    k2 = k.reshape(B, 2 * H, N, dk // 2)
    scores = jnp.einsum("bhqd,bhkd->bhqk", q2, k2) / math.sqrt(dk // 2)
    p = jax.nn.softmax(scores, axis=-1).reshape(B, H, 2, N, N)
    p = p[:, :, 0] - lambda_full * p[:, :, 1]
    x = jnp.einsum("bhqk,bhkd->bhqd", p, v)
    x = x.transpose(0, 2, 1, 3).reshape(B, N, H * dk)
    out = (x.reshape(B * N, d_model) @ params["wo"] + params["bo"]).reshape(B, N, d_model)
    return out, p


if __name__ == "__main__":
    root = jax.random.PRNGKey(0)
    k_params, kx, kq, kk, kv, k2p, k2x = jax.random.split(root, 7)

    # --- config 1: small shapes (fallback non-lane-aligned layouts), self-attention ---
    h, d_model = 4, 32          # -> diff_num_head=2, diff_d_k=16
    B, N = 2, 8
    params = init_params(k_params, h, d_model)

    x_in = jax.random.normal(kx, (B, N, d_model), dtype=jnp.float32)
    out, _ = diff_mha_forward(params, x_in, x_in, x_in)
    out = jax.block_until_ready(out)
    ref, _ = diff_mha_reference(params, x_in, x_in, x_in)
    np.testing.assert_allclose(np.asarray(out), np.asarray(ref), rtol=5e-3, atol=5e-3)

    # --- config 1b: cross-attention with attention weights returned ---
    q_in = jax.random.normal(kq, (B, N, d_model), dtype=jnp.float32)
    k_in = jax.random.normal(kk, (B, N, d_model), dtype=jnp.float32)
    v_in = jax.random.normal(kv, (B, N, d_model), dtype=jnp.float32)
    out2, attn2 = diff_mha_forward(params, q_in, k_in, v_in, return_attn=True)
    out2 = jax.block_until_ready(out2)
    ref2, ref_attn2 = diff_mha_reference(params, q_in, k_in, v_in)
    np.testing.assert_allclose(np.asarray(out2), np.asarray(ref2), rtol=5e-3, atol=5e-3)
    np.testing.assert_allclose(np.asarray(attn2), np.asarray(ref_attn2), rtol=5e-3, atol=5e-3)

    # --- config 2: lane-aligned head dim (dk=128): folded V/output layouts, query
    #     tiling and multi-tile flash accumulation over the KV axis, self-attention ---
    h2, d_model2 = 2, 128       # -> diff_num_head=1, diff_d_k=128
    B2, N2 = 1, 1024
    params2 = init_params(k2p, h2, d_model2)
    x_in2 = jax.random.normal(k2x, (B2, N2, d_model2), dtype=jnp.float32)
    out3, _ = diff_mha_forward(params2, x_in2, x_in2, x_in2)
    out3 = jax.block_until_ready(out3)
    ref3, _ = diff_mha_reference(params2, x_in2, x_in2, x_in2)
    np.testing.assert_allclose(np.asarray(out3), np.asarray(ref3), rtol=1e-2, atol=1e-2)

    print("KERNEL_OK")
</pallas_src>

<mosaic_0001>
module attributes {stable_mosaic.version = 11 : i64} {
  func.func @kernel(%arg0: i32, %arg1: i32, %arg2: i32, %arg3: memref<16x128xbf16, #tpu.memory_space<vmem>>, %arg4: memref<128x128xbf16, #tpu.memory_space<vmem>>, %arg5: memref<128x128xbf16, #tpu.memory_space<vmem>>, %arg6: memref<128x128xbf16, #tpu.memory_space<vmem>>, %arg7: memref<1x128xf32, #tpu.memory_space<vmem>>, %arg8: memref<1x128xf32, #tpu.memory_space<vmem>>, %arg9: memref<1x128xf32, #tpu.memory_space<vmem>>, %arg10: memref<16x128xbf16, #tpu.memory_space<vmem>>, %arg11: memref<16x128xbf16, #tpu.memory_space<vmem>>, %arg12: memref<16x128xbf16, #tpu.memory_space<vmem>>, %arg13: memref<16x128xf32, #tpu.memory_space<vmem>>, %arg14: memref<16x128xf32, #tpu.memory_space<vmem>>, %arg15: memref<16x128xf32, #tpu.memory_space<vmem>>) attributes {dimension_semantics = [#tpu.dimension_semantics<parallel>, #tpu.dimension_semantics<parallel>, #tpu.dimension_semantics<arbitrary>], iteration_bounds = array<i64: 1, 1, 1>, scalar_prefetch = 0 : i64, scratch_operands = 3 : i64, tpu.core_type = #tpu.core_type<tc>, window_params = [{transform_indices = @transform_0, window_bounds = array<i64: 16, 128>}, {transform_indices = @transform_1, window_bounds = array<i64: 128, 128>}, {transform_indices = @transform_2, window_bounds = array<i64: 128, 128>}, {transform_indices = @transform_3, window_bounds = array<i64: 128, 128>}, {transform_indices = @transform_4, window_bounds = array<i64: 1, 128>}, {transform_indices = @transform_5, window_bounds = array<i64: 1, 128>}, {transform_indices = @transform_6, window_bounds = array<i64: 1, 128>}, {transform_indices = @transform_7, window_bounds = array<i64: 16, 128>}, {transform_indices = @transform_8, window_bounds = array<i64: 16, 128>}, {transform_indices = @transform_9, window_bounds = array<i64: 16, 128>}]} {
    %c0_i32 = arith.constant 0 : i32
    %0 = arith.cmpi eq, %arg2, %c0_i32 : i32
    %1 = arith.extui %0 : i1 to i32
    %c0_i32_0 = arith.constant 0 : i32
    %2 = arith.cmpi ne, %1, %c0_i32_0 : i32
    scf.if %2 {
      %cst_24 = arith.constant 0.000000e+00 : f32
      %22 = vector.broadcast %cst_24 : f32 to vector<16x128xf32>
      %c0_25 = arith.constant 0 : index
      %c0_26 = arith.constant 0 : index
      %23 = vector.load %arg13[%c0_25, %c0_26] : memref<16x128xf32, #tpu.memory_space<vmem>>, vector<16x128xf32>
      tpu.vector_store %arg13[%c0_25, %c0_26], %22 {strides = array<i32>} : memref<16x128xf32, #tpu.memory_space<vmem>>, vector<16x128xf32>,
      %cst_27 = arith.constant 0.000000e+00 : f32
      %24 = vector.broadcast %cst_27 : f32 to vector<16x128xf32>
      %c0_28 = arith.constant 0 : index
      %c0_29 = arith.constant 0 : index
      %25 = vector.load %arg14[%c0_28, %c0_29] : memref<16x128xf32, #tpu.memory_space<vmem>>, vector<16x128xf32>
      tpu.vector_store %arg14[%c0_28, %c0_29], %24 {strides = array<i32>} : memref<16x128xf32, #tpu.memory_space<vmem>>, vector<16x128xf32>,
      %cst_30 = arith.constant 0.000000e+00 : f32
      %26 = vector.broadcast %cst_30 : f32 to vector<16x128xf32>
      %c0_31 = arith.constant 0 : index
      %c0_32 = arith.constant 0 : index
      %27 = vector.load %arg15[%c0_31, %c0_32] : memref<16x128xf32, #tpu.memory_space<vmem>>, vector<16x128xf32>
      tpu.vector_store %arg15[%c0_31, %c0_32], %26 {strides = array<i32>} : memref<16x128xf32, #tpu.memory_space<vmem>>, vector<16x128xf32>,
    } else {
    }
    %c0 = arith.constant 0 : index
    %c0_1 = arith.constant 0 : index
    %3 = vector.load %arg3[%c0, %c0_1] : memref<16x128xbf16, #tpu.memory_space<vmem>>, vector<16x128xbf16>
    %c0_2 = arith.constant 0 : index
    %c0_3 = arith.constant 0 : index
    %4 = vector.load %arg13[%c0_2, %c0_3] : memref<16x128xf32, #tpu.memory_space<vmem>>, vector<16x128xf32>
    %c0_4 = arith.constant 0 : index
    %c0_5 = arith.constant 0 : index
    %5 = vector.load %arg4[%c0_4, %c0_5] : memref<128x128xbf16, #tpu.memory_space<vmem>>, vector<128x128xbf16>
    %cst = arith.constant dense<0.000000e+00> : vector<16x128xf32>
    %6 = tpu.matmul %3, %5, %cst {dimension_numbers = #tpu.dot_dimension_numbers<[1], [0], [0], [1], [0, 0, 1, 1], [], []>} : vector<16x128xbf16>, vector<128x128xbf16>, vector<16x128xf32> -> vector<16x128xf32>
    %7 = arith.addf %4, %6 : vector<16x128xf32>
    %c0_6 = arith.constant 0 : index
    %c0_7 = arith.constant 0 : index
    %8 = vector.load %arg13[%c0_6, %c0_7] : memref<16x128xf32, #tpu.memory_space<vmem>>, vector<16x128xf32>
    tpu.vector_store %arg13[%c0_6, %c0_7], %7 {strides = array<i32>} : memref<16x128xf32, #tpu.memory_space<vmem>>, vector<16x128xf32>,
    %c0_8 = arith.constant 0 : index
    %c0_9 = arith.constant 0 : index
    %9 = vector.load %arg14[%c0_8, %c0_9] : memref<16x128xf32, #tpu.memory_space<vmem>>, vector<16x128xf32>
    %c0_10 = arith.constant 0 : index
    %c0_11 = arith.constant 0 : index
    %10 = vector.load %arg5[%c0_10, %c0_11] : memref<128x128xbf16, #tpu.memory_space<vmem>>, vector<128x128xbf16>
    %cst_12 = arith.constant dense<0.000000e+00> : vector<16x128xf32>
    %11 = tpu.matmul %3, %10, %cst_12 {dimension_numbers = #tpu.dot_dimension_numbers<[1], [0], [0], [1], [0, 0, 1, 1], [], []>} : vector<16x128xbf16>, vector<128x128xbf16>, vector<16x128xf32> -> vector<16x128xf32>
    %12 = arith.addf %9, %11 : vector<16x128xf32>
    %c0_13 = arith.constant 0 : index
    %c0_14 = arith.constant 0 : index
    %13 = vector.load %arg14[%c0_13, %c0_14] : memref<16x128xf32, #tpu.memory_space<vmem>>, vector<16x128xf32>
    tpu.vector_store %arg14[%c0_13, %c0_14], %12 {strides = array<i32>} : memref<16x128xf32, #tpu.memory_space<vmem>>, vector<16x128xf32>,
    %c0_15 = arith.constant 0 : index
    %c0_16 = arith.constant 0 : index
    %14 = vector.load %arg15[%c0_15, %c0_16] : memref<16x128xf32, #tpu.memory_space<vmem>>, vector<16x128xf32>
    %c0_17 = arith.constant 0 : index
    %c0_18 = arith.constant 0 : index
    %15 = vector.load %arg6[%c0_17, %c0_18] : memref<128x128xbf16, #tpu.memory_space<vmem>>, vector<128x128xbf16>
    %cst_19 = arith.constant dense<0.000000e+00> : vector<16x128xf32>
    %16 = tpu.matmul %3, %15, %cst_19 {dimension_numbers = #tpu.dot_dimension_numbers<[1], [0], [0], [1], [0, 0, 1, 1], [], []>} : vector<16x128xbf16>, vector<128x128xbf16>, vector<16x128xf32> -> vector<16x128xf32>
    %17 = arith.addf %14, %16 : vector<16x128xf32>
    %c0_20 = arith.constant 0 : index
    %c0_21 = arith.constant 0 : index
    %18 = vector.load %arg15[%c0_20, %c0_21] : memref<16x128xf32, #tpu.memory_space<vmem>>, vector<16x128xf32>
    tpu.vector_store %arg15[%c0_20, %c0_21], %17 {strides = array<i32>} : memref<16x128xf32, #tpu.memory_space<vmem>>, vector<16x128xf32>,
    %c0_i32_22 = arith.constant 0 : i32
    %19 = arith.cmpi eq, %arg2, %c0_i32_22 : i32
    %20 = arith.extui %19 : i1 to i32
    %c0_i32_23 = arith.constant 0 : i32
    %21 = arith.cmpi ne, %20, %c0_i32_23 : i32
    scf.if %21 {
      %c0_24 = arith.constant 0 : index
      %c0_25 = arith.constant 0 : index
      %22 = vector.load %arg13[%c0_24, %c0_25] : memref<16x128xf32, #tpu.memory_space<vmem>>, vector<16x128xf32>
      %c0_26 = arith.constant 0 : index
      %c0_27 = arith.constant 0 : index
      %23 = vector.load %arg7[%c0_26, %c0_27] : memref<1x128xf32, #tpu.memory_space<vmem>>, vector<1x128xf32>
      %24 = vector.broadcast %23 : vector<1x128xf32> to vector<16x128xf32>
      %25 = arith.addf %22, %24 : vector<16x128xf32>
      %cst_28 = arith.constant 0.353553385 : f32
      %26 = vector.broadcast %cst_28 : f32 to vector<16x128xf32>
      %27 = arith.mulf %25, %26 : vector<16x128xf32>
      %28 = arith.truncf %27 : vector<16x128xf32> to vector<16x128xbf16>
      %c0_29 = arith.constant 0 : index
      %c0_30 = arith.constant 0 : index
      %29 = vector.load %arg10[%c0_29, %c0_30] : memref<16x128xbf16, #tpu.memory_space<vmem>>, vector<16x128xbf16>
      tpu.vector_store %arg10[%c0_29, %c0_30], %28 {strides = array<i32>} : memref<16x128xbf16, #tpu.memory_space<vmem>>, vector<16x128xbf16>,
      %c0_31 = arith.constant 0 : index
      %c0_32 = arith.constant 0 : index
      %30 = vector.load %arg14[%c0_31, %c0_32] : memref<16x128xf32, #tpu.memory_space<vmem>>, vector<16x128xf32>
      %c0_33 = arith.constant 0 : index
      %c0_34 = arith.constant 0 : index
      %31 = vector.load %arg8[%c0_33, %c0_34] : memref<1x128xf32, #tpu.memory_space<vmem>>, vector<1x128xf32>
      %32 = vector.broadcast %31 : vector<1x128xf32> to vector<16x128xf32>
      %33 = arith.addf %30, %32 : vector<16x128xf32>
      %34 = arith.truncf %33 : vector<16x128xf32> to vector<16x128xbf16>
      %c0_35 = arith.constant 0 : index
      %c0_36 = arith.constant 0 : index
      %35 = vector.load %arg11[%c0_35, %c0_36] : memref<16x128xbf16, #tpu.memory_space<vmem>>, vector<16x128xbf16>
      tpu.vector_store %arg11[%c0_35, %c0_36], %34 {strides = array<i32>} : memref<16x128xbf16, #tpu.memory_space<vmem>>, vector<16x128xbf16>,
      %c0_37 = arith.constant 0 : index
      %c0_38 = arith.constant 0 : index
      %36 = vector.load %arg15[%c0_37, %c0_38] : memref<16x128xf32, #tpu.memory_space<vmem>>, vector<16x128xf32>
      %c0_39 = arith.constant 0 : index
      %c0_40 = arith.constant 0 : index
      %37 = vector.load %arg9[%c0_39, %c0_40] : memref<1x128xf32, #tpu.memory_space<vmem>>, vector<1x128xf32>
      %38 = vector.broadcast %37 : vector<1x128xf32> to vector<16x128xf32>
      %39 = arith.addf %36, %38 : vector<16x128xf32>
      %40 = arith.truncf %39 : vector<16x128xf32> to vector<16x128xbf16>
      %c0_41 = arith.constant 0 : index
      %c0_42 = arith.constant 0 : index
      %41 = vector.load %arg12[%c0_41, %c0_42] : memref<16x128xbf16, #tpu.memory_space<vmem>>, vector<16x128xbf16>
      tpu.vector_store %arg12[%c0_41, %c0_42], %40 {strides = array<i32>} : memref<16x128xbf16, #tpu.memory_space<vmem>>, vector<16x128xbf16>,
    } else {
    }
    return
  }
  func.func @transform_0(%arg0: i32, %arg1: i32, %arg2: i32) -> (i32, i32) {
    %c0_i32 = arith.constant 0 : i32
    return %arg0, %arg2 : i32, i32
  }
  func.func @transform_1(%arg0: i32, %arg1: i32, %arg2: i32) -> (i32, i32) {
    %c0_i32 = arith.constant 0 : i32
    return %arg2, %arg1 : i32, i32
  }
  func.func @transform_2(%arg0: i32, %arg1: i32, %arg2: i32) -> (i32, i32) {
    %c0_i32 = arith.constant 0 : i32
    return %arg2, %arg1 : i32, i32
  }
  func.func @transform_3(%arg0: i32, %arg1: i32, %arg2: i32) -> (i32, i32) {
    %c0_i32 = arith.constant 0 : i32
    return %arg2, %arg1 : i32, i32
  }
  func.func @transform_4(%arg0: i32, %arg1: i32, %arg2: i32) -> (i32, i32) {
    %c0_i32 = arith.constant 0 : i32
    %c0_i32_0 = arith.constant 0 : i32
    return %c0_i32, %arg1 : i32, i32
  }
  func.func @transform_5(%arg0: i32, %arg1: i32, %arg2: i32) -> (i32, i32) {
    %c0_i32 = arith.constant 0 : i32
    %c0_i32_0 = arith.constant 0 : i32
    return %c0_i32, %arg1 : i32, i32
  }
  func.func @transform_6(%arg0: i32, %arg1: i32, %arg2: i32) -> (i32, i32) {
    %c0_i32 = arith.constant 0 : i32
    %c0_i32_0 = arith.constant 0 : i32
    return %c0_i32, %arg1 : i32, i32
  }
  func.func @transform_7(%arg0: i32, %arg1: i32, %arg2: i32) -> (i32, i32) {
    %c0_i32 = arith.constant 0 : i32
    return %arg0, %arg1 : i32, i32
  }
  func.func @transform_8(%arg0: i32, %arg1: i32, %arg2: i32) -> (i32, i32) {
    %c0_i32 = arith.constant 0 : i32
    return %arg0, %arg1 : i32, i32
  }
  func.func @transform_9(%arg0: i32, %arg1: i32, %arg2: i32) -> (i32, i32) {
    %c0_i32 = arith.constant 0 : i32
    return %arg0, %arg1 : i32, i32
  }
}

</mosaic_0001>

<llo_original>
// kernel: tpu_custom_call.1
$region0: #{tpu_custom_call.1}
  #allocation0 [shape = 'u32[]', space=smem, size = 0x4, offset = 0x4, fixed_abs, tag = 'smem constant byte address 0x4 - core index']
  #allocation1 [shape = 'u32[144,128]{1,0:T(1,128)}', space=vmem, size = 0x12000, scoped, tag = 'internal scratch']
  #allocation2 [shape = 'f32[16,128]{1,0:T(8,128)}', space=vmem, size = 0x2000, scoped, tag = 'scratch operand']
  #allocation3 [shape = 'f32[16,128]{1,0:T(8,128)}', space=vmem, size = 0x2000, scoped, tag = 'scratch operand']
  #allocation4 [shape = 'f32[16,128]{1,0:T(8,128)}', space=vmem, size = 0x2000, scoped, tag = 'scratch operand']
  %s0 = inlined_call_operand.hbm [shape: bf16[16,128], index: 0, kind: input, shape index: {}]
  %s1 = inlined_call_operand.hbm [shape: bf16[128,128], index: 1, kind: input, shape index: {}]
  %s2 = inlined_call_operand.hbm [shape: bf16[128,128], index: 2, kind: input, shape index: {}]
  %s3 = inlined_call_operand.hbm [shape: bf16[128,128], index: 3, kind: input, shape index: {}]
  %s4 = inlined_call_operand.vmem [shape: f32[1,128], index: 4, kind: input, shape index: {}]
  %s5 = inlined_call_operand.vmem [shape: f32[1,128], index: 5, kind: input, shape index: {}]
  %s6 = inlined_call_operand.vmem [shape: f32[1,128], index: 6, kind: input, shape index: {}]
  %s7 = inlined_call_operand.hbm [shape: bf16[16,128], index: 7, kind: output, shape index: {0}]
  %s8 = inlined_call_operand.hbm [shape: bf16[16,128], index: 8, kind: output, shape index: {1}]
  %s9 = inlined_call_operand.hbm [shape: bf16[16,128], index: 9, kind: output, shape index: {2}]
  %10 = xla_tuple %s7, %s8, %s9
  %s11 = sld [smem:[#allocation0]]
  $region78: #{tpu_custom_call.1} parent=0
    _
  %s13 = ssub.s32 1, %s11
  %s14 = scalar_select 0, %s13, %s11
  $region1: #{tpu_custom_call.1} parent=0
    #allocation5 [shape = 'u8[4096]{0}', space=vmem, size = 0x1000, scoped, tag = 'input window, operand 0, single buffered']
    #allocation6 [shape = 's32[1]{0}', space=sflag, size = 0x4, scoped, tag = 'scoped memory for tpu_custom_call.1']
    #allocation7 [shape = 's32[1]{0}', space=sflag, size = 0x4, scoped, tag = 'scoped memory for tpu_custom_call.1']
    #allocation8 [shape = 'u8[32768]{0}', space=vmem, size = 0x8000, scoped, tag = 'input window, operand 1, single buffered']
    #allocation9 [shape = 's32[1]{0}', space=sflag, size = 0x4, scoped, tag = 'scoped memory for tpu_custom_call.1']
    #allocation10 [shape = 'u8[32768]{0}', space=vmem, size = 0x8000, scoped, tag = 'input window, operand 2, single buffered']
    #allocation11 [shape = 'u8[32768]{0}', space=vmem, size = 0x8000, scoped, tag = 'input window, operand 3, single buffered']
    #allocation12 [shape = 's32[1]{0}', space=sflag, size = 0x4, scoped, tag = 'scoped memory for tpu_custom_call.1']
    #allocation13 [shape = 'u8[4096]{0}', space=vmem, size = 0x1000, scoped, tag = 'output window, operand 0, single buffered']
    #allocation14 [shape = 'u8[4096]{0}', space=vmem, size = 0x1000, scoped, tag = 'output window, operand 1, single buffered']
    #allocation15 [shape = 's32[1]{0}', space=sflag, size = 0x4, scoped, tag = 'scoped memory for tpu_custom_call.1']
    #allocation16 [shape = 'u8[4096]{0}', space=vmem, size = 0x1000, scoped, tag = 'output window, operand 2, single buffered']
    %15 = vsyncpa [#allocation6], 0
    %16 = vsyncpa [#allocation9], 0
    %17 = vsyncpa [#allocation12], 0
    %18 = vsyncpa [#allocation7], 0
    %19 = vsyncpa [#allocation15], 0
    // Predicated region
    $region2: #{tpu_custom_call.1} parent=1 // pred_check
      _
    $region3: #{tpu_custom_call.1} parent=1 // pred_check_branch
      %21 = sbr.rel (0) target = $region5
    $region4: #{tpu_custom_call.1} parent=1 // pred_region
      %s23 = ssub.s32 128, 128
      %24 = vsyncadd [#allocation6], %s23
      %s25 = sshll.u32 [#allocation5], 4
      %s26 = int_to_ptr.vmem [resolvable:$true] %s25
      %31 = dma.hbm_to_vmem [thread:$0]  %s0, 128, %s26, [#allocation6], 64, 64, 4
    $region5: #{tpu_custom_call.1} parent=1 // pred_fallthru
      _
    // Predicated region
    $region6: #{tpu_custom_call.1} parent=1 // pred_check
      _
    $region7: #{tpu_custom_call.1} parent=1 // pred_check_branch
      %33 = sbr.rel (0) target = $region9
    $region8: #{tpu_custom_call.1} parent=1 // pred_region
      %s35 = ssub.s32 1024, 1024
      %36 = vsyncadd [#allocation9], %s35
      %s37 = sshll.u32 [#allocation8], 4
      %s38 = int_to_ptr.vmem [resolvable:$true] %s37
      %43 = dma.hbm_to_vmem [thread:$0]  %s1, 1024, %s38, [#allocation9], 64, 64, 4
    $region9: #{tpu_custom_call.1} parent=1 // pred_fallthru
      _
    // Predicated region
    $region10: #{tpu_custom_call.1} parent=1 // pred_check
      _
    $region11: #{tpu_custom_call.1} parent=1 // pred_check_branch
      %45 = sbr.rel (0) target = $region13
    $region12: #{tpu_custom_call.1} parent=1 // pred_region
      %s47 = ssub.s32 1024, 1024
      %48 = vsyncadd [#allocation9], %s47
      %s49 = sshll.u32 [#allocation10], 4
      %s50 = int_to_ptr.vmem [resolvable:$true] %s49
      %55 = dma.hbm_to_vmem [thread:$0]  %s2, 1024, %s50, [#allocation9], 64, 64, 4
    $region13: #{tpu_custom_call.1} parent=1 // pred_fallthru
      _
    // Predicated region
    $region14: #{tpu_custom_call.1} parent=1 // pred_check
      _
    $region15: #{tpu_custom_call.1} parent=1 // pred_check_branch
      %57 = sbr.rel (0) target = $region17
    $region16: #{tpu_custom_call.1} parent=1 // pred_region
      %s59 = ssub.s32 1024, 1024
      %60 = vsyncadd [#allocation12], %s59
      %s61 = sshll.u32 [#allocation11], 4
      %s62 = int_to_ptr.vmem [resolvable:$true] %s61
      %67 = dma.hbm_to_vmem [thread:$0]  %s3, 1024, %s62, [#allocation12], 64, 64, 4
    $region17: #{tpu_custom_call.1} parent=1 // pred_fallthru
      _
    // Predicated region
    $region18: #{tpu_custom_call.1} parent=1 // pred_check
      _
    $region19: #{tpu_custom_call.1} parent=1 // pred_check_branch
      %69 = sbr.rel (0) target = $region21
    $region20: #{tpu_custom_call.1} parent=1 // pred_region
      _
    $region21: #{tpu_custom_call.1} parent=1 // pred_fallthru
      _
    // Predicated region
    $region22: #{tpu_custom_call.1} parent=1 // pred_check
      _
    $region23: #{tpu_custom_call.1} parent=1 // pred_check_branch
      %71 = sbr.rel (0) target = $region25
    $region24: #{tpu_custom_call.1} parent=1 // pred_region
      _
    $region25: #{tpu_custom_call.1} parent=1 // pred_fallthru
      _
    // Predicated region
    $region26: #{tpu_custom_call.1} parent=1 // pred_check
      _
    $region27: #{tpu_custom_call.1} parent=1 // pred_check_branch
      %73 = sbr.rel (0) target = $region29
    $region28: #{tpu_custom_call.1} parent=1 // pred_region
      _
    $region29: #{tpu_custom_call.1} parent=1 // pred_fallthru
      _
    // Predicated region
    $region30: #{tpu_custom_call.1} parent=1 // pred_check
      _
    $region31: #{tpu_custom_call.1} parent=1 // pred_check_branch
      %75 = sbr.rel (0) target = $region33
    $region32: #{tpu_custom_call.1} parent=1 // pred_region
      %76 = dma.done [#allocation6], 128
    $region33: #{tpu_custom_call.1} parent=1 // pred_fallthru
      _
    // Predicated region
    $region34: #{tpu_custom_call.1} parent=1 // pred_check
      _
    $region35: #{tpu_custom_call.1} parent=1 // pred_check_branch
      %78 = sbr.rel (0) target = $region37
    $region36: #{tpu_custom_call.1} parent=1 // pred_region
      %79 = dma.done [#allocation9], 1024
    $region37: #{tpu_custom_call.1} parent=1 // pred_fallthru
      _
    // Predicated region
    $region38: #{tpu_custom_call.1} parent=1 // pred_check
      _
    $region39: #{tpu_custom_call.1} parent=1 // pred_check_branch
      %81 = sbr.rel (0) target = $region41
    $region40: #{tpu_custom_call.1} parent=1 // pred_region
      %82 = dma.done [#allocation9], 1024
    $region41: #{tpu_custom_call.1} parent=1 // pred_fallthru
      _
    // Predicated region
    $region42: #{tpu_custom_call.1} parent=1 // pred_check
      _
    $region43: #{tpu_custom_call.1} parent=1 // pred_check_branch
      %84 = sbr.rel (0) target = $region45
    $region44: #{tpu_custom_call.1} parent=1 // pred_region
      %85 = dma.done [#allocation12], 1024
    $region45: #{tpu_custom_call.1} parent=1 // pred_fallthru
      _
    %p87 = scmp.eq.s32.totalorder 0, 0
    // Predicated region
    $region46: #{tpu_custom_call.1} parent=1 // pred_check
      %p88 = pneg %p87
    $region47: #{tpu_custom_call.1} parent=1 // pred_check_branch
      %90 = sbr.rel (%p88) target = $region49
    $region48: #{tpu_custom_call.1} parent=1 // pred_region
      %91 = vst [vmem:[#allocation2] sm:$0xff] 0.0
      %92 = vst [vmem:[#allocation2 + $0x8] sm:$0xff] 0.0
      %93 = vst [vmem:[#allocation3] sm:$0xff] 0.0
      %94 = vst [vmem:[#allocation3 + $0x8] sm:$0xff] 0.0
      %95 = vst [vmem:[#allocation4] sm:$0xff] 0.0
      %96 = vst [vmem:[#allocation4 + $0x8] sm:$0xff] 0.0
    $region49: #{tpu_custom_call.1} parent=1 // pred_fallthru
      _
    %v97 = vld [vmem:[#allocation5] sm:$0xf]
    %v98 = vld [vmem:[#allocation5 + $0x4] sm:$0xf]
    %v99 = vld [vmem:[#allocation2] sm:$0xff]
    %v100 = vld [vmem:[#allocation2 + $0x8] sm:$0xff]
    %v101 = vld [vmem:[#allocation8] sm:$0xf]
    %v102 = vld [vmem:[#allocation8 + $0x4] sm:$0xf]
    %v103 = vld [vmem:[#allocation8 + $0x8] sm:$0xf]
    %v104 = vld [vmem:[#allocation8 + $0xc] sm:$0xf]
    %v105 = vld [vmem:[#allocation8 + $0x10] sm:$0xf]
    %v106 = vld [vmem:[#allocation8 + $0x14] sm:$0xf]
    %v107 = vld [vmem:[#allocation8 + $0x18] sm:$0xf]
    %v108 = vld [vmem:[#allocation8 + $0x1c] sm:$0xf]
    %v109 = vld [vmem:[#allocation8 + $0x20] sm:$0xf]
    %v110 = vld [vmem:[#allocation8 + $0x24] sm:$0xf]
    %v111 = vld [vmem:[#allocation8 + $0x28] sm:$0xf]
    %v112 = vld [vmem:[#allocation8 + $0x2c] sm:$0xf]
    %v113 = vld [vmem:[#allocation8 + $0x30] sm:$0xf]
    %v114 = vld [vmem:[#allocation8 + $0x34] sm:$0xf]
    %v115 = vld [vmem:[#allocation8 + $0x38] sm:$0xf]
    %v116 = vld [vmem:[#allocation8 + $0x3c] sm:$0xf]
    %v119 = vunpack.c.l.b16 %v97
    %v120 = vunpack.c.l.b16 %v98
    %v121 = vpack.c.b16 %v120, %v119
    %v139 = vunpack.c.l.b16 %v101
    %v140 = vunpack.c.l.b16 %v102
    %v141 = vunpack.c.l.b16 %v103
    %v142 = vunpack.c.l.b16 %v104
    %v143 = vunpack.c.l.b16 %v105
    %v144 = vunpack.c.l.b16 %v106
    %v145 = vunpack.c.l.b16 %v107
    %v146 = vunpack.c.l.b16 %v108
    %v147 = vunpack.c.l.b16 %v109
    %v148 = vunpack.c.l.b16 %v110
    %v149 = vunpack.c.l.b16 %v111
    %v150 = vunpack.c.l.b16 %v112
    %v151 = vunpack.c.l.b16 %v113
    %v152 = vunpack.c.l.b16 %v114
    %v153 = vunpack.c.l.b16 %v115
    %v154 = vunpack.c.l.b16 %v116
    %v155 = vpack.c.b16 %v140, %v139
    %v156 = vpack.c.b16 %v142, %v141
    %v157 = vpack.c.b16 %v144, %v143
    %v158 = vpack.c.b16 %v146, %v145
    %v159 = vpack.c.b16 %v148, %v147
    %v160 = vpack.c.b16 %v150, %v149
    %v161 = vpack.c.b16 %v152, %v151
    %v162 = vpack.c.b16 %v154, %v153
    %171 = vmatprep.subr.bf16.mxu0 0
    %172 = vmatpush1.bf16.msra.mxu0 %v155
    %173 = vmatprep.subr.bf16.mxu0 0
    %174 = vmatpush1.bf16.msra.mxu0 %v156
    %175 = vmatprep.subr.bf16.mxu0 0
    %176 = vmatpush1.bf16.msra.mxu0 %v157
    %177 = vmatprep.subr.bf16.mxu0 0
    %178 = vmatpush1.bf16.msra.mxu0 %v158
    %179 = vmatprep.subr.bf16.mxu0 0
    %180 = vmatpush1.bf16.msra.mxu0 %v159
    %181 = vmatprep.subr.bf16.mxu0 0
    %182 = vmatpush1.bf16.msra.mxu0 %v160
    %183 = vmatprep.subr.bf16.mxu0 0
    %184 = vmatpush1.bf16.msra.mxu0 %v161
    %185 = vmatprep.subr.bf16.mxu0 0
    %186 = vmatpush1.bf16.msra.mxu0 %v162
    %187 = vmatprep.subr.bf16.mxu0 0
    %188 = vmatpush1.bf16.msra.mxu0 0
    %189 = vmatprep.subr.bf16.mxu0 0
    %190 = vmatpush1.bf16.msra.mxu0 0
    %191 = vmatprep.subr.bf16.mxu0 0
    %192 = vmatpush1.bf16.msra.mxu0 0
    %193 = vmatprep.subr.bf16.mxu0 0
    %194 = vmatpush1.bf16.msra.mxu0 0
    %195 = vmatprep.subr.bf16.mxu0 0
    %196 = vmatpush1.bf16.msra.mxu0 0
    %197 = vmatprep.subr.bf16.mxu0 0
    %198 = vmatpush1.bf16.msra.mxu0 0
    %199 = vmatprep.subr.bf16.mxu0 0
    %200 = vmatpush1.bf16.msra.mxu0 0
    %201 = vmatprep.subr.bf16.mxu0 0
    %202 = vmatpush1.bf16.msra.mxu0 0
    %203 = vmatprep.mubr.bf16.mxu0 0
    %204 = vmatmul.mubr.bf16.gmra.mrb[0].mxu0 %v121
    %v205 = vpop.f32.mrb[0].mxu0
    %v206 = vadd.f32 0.0, %v205
    %v207 = vpop.f32.mrb[0].mxu0
    %v208 = vpop.f32.mrb[0].mxu0
    %v209 = vadd.f32 0.0, %v208
    %v210 = vpop.f32.mrb[0].mxu0
    %211 = vdwg.mxu0
    %v212 = vadd.f32 %v99, %v206
    %v213 = vadd.f32 %v100, %v209
    %214 = vst [vmem:[#allocation2] sm:$0xff] %v212
    %215 = vst [vmem:[#allocation2 + $0x8] sm:$0xff] %v213
    %v216 = vld [vmem:[#allocation3] sm:$0xff]
    %v217 = vld [vmem:[#allocation3 + $0x8] sm:$0xff]
    %v218 = vld [vmem:[#allocation10] sm:$0xf]
    %v219 = vld [vmem:[#allocation10 + $0x4] sm:$0xf]
    %v220 = vld [vmem:[#allocation10 + $0x8] sm:$0xf]
    %v221 = vld [vmem:[#allocation10 + $0xc] sm:$0xf]
    %v222 = vld [vmem:[#allocation10 + $0x10] sm:$0xf]
    %v223 = vld [vmem:[#allocation10 + $0x14] sm:$0xf]
    %v224 = vld [vmem:[#allocation10 + $0x18] sm:$0xf]
    %v225 = vld [vmem:[#allocation10 + $0x1c] sm:$0xf]
    %v226 = vld [vmem:[#allocation10 + $0x20] sm:$0xf]
    %v227 = vld [vmem:[#allocation10 + $0x24] sm:$0xf]
    %v228 = vld [vmem:[#allocation10 + $0x28] sm:$0xf]
    %v229 = vld [vmem:[#allocation10 + $0x2c] sm:$0xf]
    %v230 = vld [vmem:[#allocation10 + $0x30] sm:$0xf]
    %v231 = vld [vmem:[#allocation10 + $0x34] sm:$0xf]
    %v232 = vld [vmem:[#allocation10 + $0x38] sm:$0xf]
    %v233 = vld [vmem:[#allocation10 + $0x3c] sm:$0xf]
    %v250 = vunpack.c.l.b16 %v218
    %v251 = vunpack.c.l.b16 %v219
    %v252 = vunpack.c.l.b16 %v220
    %v253 = vunpack.c.l.b16 %v221
    %v254 = vunpack.c.l.b16 %v222
    %v255 = vunpack.c.l.b16 %v223
    %v256 = vunpack.c.l.b16 %v224
    %v257 = vunpack.c.l.b16 %v225
    %v258 = vunpack.c.l.b16 %v226
    %v259 = vunpack.c.l.b16 %v227
    %v260 = vunpack.c.l.b16 %v228
    %v261 = vunpack.c.l.b16 %v229
    %v262 = vunpack.c.l.b16 %v230
    %v263 = vunpack.c.l.b16 %v231
    %v264 = vunpack.c.l.b16 %v232
    %v265 = vunpack.c.l.b16 %v233
    %v266 = vpack.c.b16 %v251, %v250
    %v267 = vpack.c.b16 %v253, %v252
    %v268 = vpack.c.b16 %v255, %v254
    %v269 = vpack.c.b16 %v257, %v256
    %v270 = vpack.c.b16 %v259, %v258
    %v271 = vpack.c.b16 %v261, %v260
    %v272 = vpack.c.b16 %v263, %v262
    %v273 = vpack.c.b16 %v265, %v264
    %282 = vmatprep.subr.bf16.mxu0 0
    %283 = vmatpush1.bf16.msra.mxu0 %v266
    %284 = vmatprep.subr.bf16.mxu0 0
    %285 = vmatpush1.bf16.msra.mxu0 %v267
    %286 = vmatprep.subr.bf16.mxu0 0
    %287 = vmatpush1.bf16.msra.mxu0 %v268
    %288 = vmatprep.subr.bf16.mxu0 0
    %289 = vmatpush1.bf16.msra.mxu0 %v269
    %290 = vmatprep.subr.bf16.mxu0 0
    %291 = vmatpush1.bf16.msra.mxu0 %v270
    %292 = vmatprep.subr.bf16.mxu0 0
    %293 = vmatpush1.bf16.msra.mxu0 %v271
    %294 = vmatprep.subr.bf16.mxu0 0
    %295 = vmatpush1.bf16.msra.mxu0 %v272
    %296 = vmatprep.subr.bf16.mxu0 0
    %297 = vmatpush1.bf16.msra.mxu0 %v273
    %298 = vmatprep.subr.bf16.mxu0 0
    %299 = vmatpush1.bf16.msra.mxu0 0
    %300 = vmatprep.subr.bf16.mxu0 0
    %301 = vmatpush1.bf16.msra.mxu0 0
    %302 = vmatprep.subr.bf16.mxu0 0
    %303 = vmatpush1.bf16.msra.mxu0 0
    %304 = vmatprep.subr.bf16.mxu0 0
    %305 = vmatpush1.bf16.msra.mxu0 0
    %306 = vmatprep.subr.bf16.mxu0 0
    %307 = vmatpush1.bf16.msra.mxu0 0
    %308 = vmatprep.subr.bf16.mxu0 0
    %309 = vmatpush1.bf16.msra.mxu0 0
    %310 = vmatprep.subr.bf16.mxu0 0
    %311 = vmatpush1.bf16.msra.mxu0 0
    %312 = vmatprep.subr.bf16.mxu0 0
    %313 = vmatpush1.bf16.msra.mxu0 0
    %314 = vmatprep.mubr.bf16.mxu0 0
    %315 = vmatmul.mubr.bf16.gmra.mrb[0].mxu0 %v121
    %v316 = vpop.f32.mrb[0].mxu0
    %v317 = vadd.f32 0.0, %v316
    %v318 = vpop.f32.mrb[0].mxu0
    %v319 = vpop.f32.mrb[0].mxu0
    %v320 = vadd.f32 0.0, %v319
    %v321 = vpop.f32.mrb[0].mxu0
    %322 = vdwg.mxu0
    %v323 = vadd.f32 %v216, %v317
    %v324 = vadd.f32 %v217, %v320
    %325 = vst [vmem:[#allocation3] sm:$0xff] %v323
    %326 = vst [vmem:[#allocation3 + $0x8] sm:$0xff] %v324
    %v327 = vld [vmem:[#allocation4] sm:$0xff]
    %v328 = vld [vmem:[#allocation4 + $0x8] sm:$0xff]
    %v329 = vld [vmem:[#allocation11] sm:$0xf]
    %v330 = vld [vmem:[#allocation11 + $0x4] sm:$0xf]
    %v331 = vld [vmem:[#allocation11 + $0x8] sm:$0xf]
    %v332 = vld [vmem:[#allocation11 + $0xc] sm:$0xf]
    %v333 = vld [vmem:[#allocation11 + $0x10] sm:$0xf]
    %v334 = vld [vmem:[#allocation11 + $0x14] sm:$0xf]
    %v335 = vld [vmem:[#allocation11 + $0x18] sm:$0xf]
    %v336 = vld [vmem:[#allocation11 + $0x1c] sm:$0xf]
    %v337 = vld [vmem:[#allocation11 + $0x20] sm:$0xf]
    %v338 = vld [vmem:[#allocation11 + $0x24] sm:$0xf]
    %v339 = vld [vmem:[#allocation11 + $0x28] sm:$0xf]
    %v340 = vld [vmem:[#allocation11 + $0x2c] sm:$0xf]
    %v341 = vld [vmem:[#allocation11 + $0x30] sm:$0xf]
    %v342 = vld [vmem:[#allocation11 + $0x34] sm:$0xf]
    %v343 = vld [vmem:[#allocation11 + $0x38] sm:$0xf]
    %v344 = vld [vmem:[#allocation11 + $0x3c] sm:$0xf]
    %v361 = vunpack.c.l.b16 %v329
    %v362 = vunpack.c.l.b16 %v330
    %v363 = vunpack.c.l.b16 %v331
    %v364 = vunpack.c.l.b16 %v332
    %v365 = vunpack.c.l.b16 %v333
    %v366 = vunpack.c.l.b16 %v334
    %v367 = vunpack.c.l.b16 %v335
    %v368 = vunpack.c.l.b16 %v336
    %v369 = vunpack.c.l.b16 %v337
    %v370 = vunpack.c.l.b16 %v338
    %v371 = vunpack.c.l.b16 %v339
    %v372 = vunpack.c.l.b16 %v340
    %v373 = vunpack.c.l.b16 %v341
    %v374 = vunpack.c.l.b16 %v342
    %v375 = vunpack.c.l.b16 %v343
    %v376 = vunpack.c.l.b16 %v344
    %v377 = vpack.c.b16 %v362, %v361
    %v378 = vpack.c.b16 %v364, %v363
    %v379 = vpack.c.b16 %v366, %v365
    %v380 = vpack.c.b16 %v368, %v367
    %v381 = vpack.c.b16 %v370, %v369
    %v382 = vpack.c.b16 %v372, %v371
    %v383 = vpack.c.b16 %v374, %v373
    %v384 = vpack.c.b16 %v376, %v375
    %393 = vmatprep.subr.bf16.mxu0 0
    %394 = vmatpush1.bf16.msra.mxu0 %v377
    %395 = vmatprep.subr.bf16.mxu0 0
    %396 = vmatpush1.bf16.msra.mxu0 %v378
    %397 = vmatprep.subr.bf16.mxu0 0
    %398 = vmatpush1.bf16.msra.mxu0 %v379
    %399 = vmatprep.subr.bf16.mxu0 0
    %400 = vmatpush1.bf16.msra.mxu0 %v380
    %401 = vmatprep.subr.bf16.mxu0 0
    %402 = vmatpush1.bf16.msra.mxu0 %v381
    %403 = vmatprep.subr.bf16.mxu0 0
    %404 = vmatpush1.bf16.msra.mxu0 %v382
    %405 = vmatprep.subr.bf16.mxu0 0
    %406 = vmatpush1.bf16.msra.mxu0 %v383
    %407 = vmatprep.subr.bf16.mxu0 0
    %408 = vmatpush1.bf16.msra.mxu0 %v384
    %409 = vmatprep.subr.bf16.mxu0 0
    %410 = vmatpush1.bf16.msra.mxu0 0
    %411 = vmatprep.subr.bf16.mxu0 0
    %412 = vmatpush1.bf16.msra.mxu0 0
    %413 = vmatprep.subr.bf16.mxu0 0
    %414 = vmatpush1.bf16.msra.mxu0 0
    %415 = vmatprep.subr.bf16.mxu0 0
    %416 = vmatpush1.bf16.msra.mxu0 0
    %417 = vmatprep.subr.bf16.mxu0 0
    %418 = vmatpush1.bf16.msra.mxu0 0
    %419 = vmatprep.subr.bf16.mxu0 0
    %420 = vmatpush1.bf16.msra.mxu0 0
    %421 = vmatprep.subr.bf16.mxu0 0
    %422 = vmatpush1.bf16.msra.mxu0 0
    %423 = vmatprep.subr.bf16.mxu0 0
    %424 = vmatpush1.bf16.msra.mxu0 0
    %425 = vmatprep.mubr.bf16.mxu0 0
    %426 = vmatmul.mubr.bf16.gmra.mrb[0].mxu0 %v121
    %v427 = vpop.f32.mrb[0].mxu0
    %v428 = vadd.f32 0.0, %v427
    %v429 = vpop.f32.mrb[0].mxu0
    %v430 = vpop.f32.mrb[0].mxu0
    %v431 = vadd.f32 0.0, %v430
    %v432 = vpop.f32.mrb[0].mxu0
    %433 = vdwg.mxu0
    %v434 = vadd.f32 %v327, %v428
    %v435 = vadd.f32 %v328, %v431
    %436 = vst [vmem:[#allocation4] sm:$0xff] %v434
    %437 = vst [vmem:[#allocation4 + $0x8] sm:$0xff] %v435
    // Predicated region
    $region50: #{tpu_custom_call.1} parent=1 // pred_check
      %p438 = pneg %p87
    $region51: #{tpu_custom_call.1} parent=1 // pred_check_branch
      %440 = sbr.rel (%p438) target = $region53
    $region52: #{tpu_custom_call.1} parent=1 // pred_region
      %v441 = vld [vmem:[#allocation2] sm:$0xff]
      %v442 = vld [vmem:[#allocation2 + $0x8] sm:$0xff]
      %v443 = vld [vmem:[%s4] sm:$0x1]
      %v445 = vlaneseq
      %v446 = vshrl.u32 %v445, 7
      %v447 = vsub.s32 0, %v446
      %v448 = vrot.slane %v443, %v447
      %v450 = vadd.f32 %v441, %v448
      %v451 = vadd.f32 %v442, %v448
      %v452 = vmul.f32 %v450, 0.35355338
      %v453 = vmul.f32 %v451, 0.35355338
      %v454 = vpack.c.bf16 %v453, %v452
      %v456 = vunpack.c.l.b16 %v454
      %v457 = vunpack.c.h.b16 %v454
      %v458 = vpack.c.b16 %v456, %v456
      %v459 = vpack.c.b16 %v457, %v457
      %462 = vst [vmem:[#allocation13] sm:$0xf] %v458
      %463 = vst [vmem:[#allocation13 + $0x4] sm:$0xf] %v459
      %v464 = vld [vmem:[#allocation3] sm:$0xff]
      %v465 = vld [vmem:[#allocation3 + $0x8] sm:$0xff]
      %v466 = vld [vmem:[%s5] sm:$0x1]
      %v468 = vlaneseq
      %v469 = vshrl.u32 %v468, 7
      %v470 = vsub.s32 0, %v469
      %v471 = vrot.slane %v466, %v470
      %v473 = vadd.f32 %v464, %v471
      %v474 = vadd.f32 %v465, %v471
      %v475 = vpack.c.bf16 %v474, %v473
      %v477 = vunpack.c.l.b16 %v475
      %v478 = vunpack.c.h.b16 %v475
      %v479 = vpack.c.b16 %v477, %v477
      %v480 = vpack.c.b16 %v478, %v478
      %483 = vst [vmem:[#allocation14] sm:$0xf] %v479
      %484 = vst [vmem:[#allocation14 + $0x4] sm:$0xf] %v480
      %v485 = vld [vmem:[#allocation4] sm:$0xff]
      %v486 = vld [vmem:[#allocation4 + $0x8] sm:$0xff]
      %v487 = vld [vmem:[%s6] sm:$0x1]
      %v489 = vlaneseq
      %v490 = vshrl.u32 %v489, 7
      %v491 = vsub.s32 0, %v490
      %v492 = vrot.slane %v487, %v491
      %v494 = vadd.f32 %v485, %v492
      %v495 = vadd.f32 %v486, %v492
      %v496 = vpack.c.bf16 %v495, %v494
      %v498 = vunpack.c.l.b16 %v496
      %v499 = vunpack.c.h.b16 %v496
      %v500 = vpack.c.b16 %v498, %v498
      %v501 = vpack.c.b16 %v499, %v499
      %504 = vst [vmem:[#allocation16] sm:$0xf] %v500
      %505 = vst [vmem:[#allocation16 + $0x4] sm:$0xf] %v501
    $region53: #{tpu_custom_call.1} parent=1 // pred_fallthru
      _
    // Predicated region
    $region54: #{tpu_custom_call.1} parent=1 // pred_check
      _
    $region55: #{tpu_custom_call.1} parent=1 // pred_check_branch
      %507 = sbr.rel (0) target = $region57
    $region56: #{tpu_custom_call.1} parent=1 // pred_region
      %s509 = ssub.s32 128, 128
      %510 = vsyncadd [#allocation7], %s509
      %s511 = sshll.u32 [#allocation13], 4
      %s512 = int_to_ptr.vmem [resolvable:$true] %s511
      %517 = dma.vmem_to_hbm [thread:$0]  %s512, 128, %s7, [#allocation7], 64, 64, 4
    $region57: #{tpu_custom_call.1} parent=1 // pred_fallthru
      _
    // Predicated region
    $region58: #{tpu_custom_call.1} parent=1 // pred_check
      _
    $region59: #{tpu_custom_call.1} parent=1 // pred_check_branch
      %519 = sbr.rel (0) target = $region61
    $region60: #{tpu_custom_call.1} parent=1 // pred_region
      %s521 = ssub.s32 128, 128
      %522 = vsyncadd [#allocation15], %s521
      %s523 = sshll.u32 [#allocation14], 4
      %s524 = int_to_ptr.vmem [resolvable:$true] %s523
      %529 = dma.vmem_to_hbm [thread:$0]  %s524, 128, %s8, [#allocation15], 64, 64, 4
    $region61: #{tpu_custom_call.1} parent=1 // pred_fallthru
      _
    // Predicated region
    $region62: #{tpu_custom_call.1} parent=1 // pred_check
      _
    $region63: #{tpu_custom_call.1} parent=1 // pred_check_branch
      %531 = sbr.rel (0) target = $region65
    $region64: #{tpu_custom_call.1} parent=1 // pred_region
      %s533 = ssub.s32 128, 128
      %534 = vsyncadd [#allocation15], %s533
      %s535 = sshll.u32 [#allocation16], 4
      %s536 = int_to_ptr.vmem [resolvable:$true] %s535
      %541 = dma.vmem_to_hbm [thread:$0]  %s536, 128, %s9, [#allocation15], 64, 64, 4
    $region65: #{tpu_custom_call.1} parent=1 // pred_fallthru
      _
    // Predicated region
    $region66: #{tpu_custom_call.1} parent=1 // pred_check
      _
    $region67: #{tpu_custom_call.1} parent=1 // pred_check_branch
      %543 = sbr.rel (0) target = $region69
    $region68: #{tpu_custom_call.1} parent=1 // pred_region
      %544 = dma.done [#allocation7], 128
    $region69: #{tpu_custom_call.1} parent=1 // pred_fallthru
      _
    // Predicated region
    $region70: #{tpu_custom_call.1} parent=1 // pred_check
      _
    $region71: #{tpu_custom_call.1} parent=1 // pred_check_branch
      %546 = sbr.rel (0) target = $region73
    $region72: #{tpu_custom_call.1} parent=1 // pred_region
      %547 = dma.done [#allocation15], 128
    $region73: #{tpu_custom_call.1} parent=1 // pred_fallthru
      _
    // Predicated region
    $region74: #{tpu_custom_call.1} parent=1 // pred_check
      _
    $region75: #{tpu_custom_call.1} parent=1 // pred_check_branch
      %549 = sbr.rel (0) target = $region77
    $region76: #{tpu_custom_call.1} parent=1 // pred_region
      %550 = dma.done [#allocation15], 128
    $region77: #{tpu_custom_call.1} parent=1 // pred_fallthru
      _
    %551 = vsyncpa [#allocation6], 1
    %552 = vsyncpa [#allocation9], 1
    %553 = vsyncpa [#allocation12], 1
    %554 = vsyncpa [#allocation7], 1
    %555 = vsyncpa [#allocation15], 1

</llo_original>
